<compile_context>
chip_gen: v7x
topology: tpu7x:2x2x1
jax: 0.10.0
libtpu: 0.0.40
codegen_flags: <defaults>
</compile_context>

<pallas_src>
import functools

import jax
import jax.numpy as jnp
from jax.experimental import pallas as pl
from jax.experimental.pallas import tpu as pltpu


def _round_up(n, m):
    return ((n + m - 1) // m) * m


def _pad2(a, rows, cols):
    r, c = a.shape
    return jnp.pad(a, ((0, rows - r), (0, cols - c)))


def state_decoder_kernel(
    x_ref,
    w1_ref, b1_ref,
    w2_ref, b2_ref,
    w3_ref, b3_ref,
    w4_ref, b4_ref,
    w5_ref, b5_ref,
    wh_ref, bh_ref,   # fused [out_obs | out_act] head
    out_ref,
):
    def dense_relu(h, w_ref, b_ref):
        # bf16 operands on the MXU, f32 accumulation / bias / ReLU on the VPU.
        y = jnp.dot(h, w_ref[...], preferred_element_type=jnp.float32)
        y = jnp.maximum(y + b_ref[...], 0.0)
        return y.astype(jnp.bfloat16)          # downcast only for the next MXU operand

    h = x_ref[...]                             # bf16 [TB, L_pad]
    h = dense_relu(h, w1_ref, b1_ref)
    h = dense_relu(h, w2_ref, b2_ref)
    h = dense_relu(h, w3_ref, b3_ref)
    h = dense_relu(h, w4_ref, b4_ref)
    h = dense_relu(h, w5_ref, b5_ref)

    # Single fused head matmul -> one contiguous, lane-dense store.
    y = jnp.dot(h, wh_ref[...], preferred_element_type=jnp.float32) + bh_ref[...]
    out_ref[...] = y.astype(out_ref.dtype)


@functools.partial(jax.jit, static_argnames=())
def state_decoder_forward(x, params):
    """x: [B, latent_dim] float32. params: dict of transposed weights / biases (f32)."""
    B, latent_dim = x.shape
    hidden_dim = params["w1"].shape[1]
    obs_dim = params["wo"].shape[1]
    z_dim = params["wa"].shape[1]
    out_dim = obs_dim + z_dim

    # ---- padded geometry ---------------------------------------------------
    L_pad = _round_up(latent_dim, 128)
    H_pad = _round_up(hidden_dim, 128)
    O_pad = _round_up(out_dim, 128)
    B8 = _round_up(B, 8)
    TB = 256 if B8 >= 256 else B8              # batch tile (rows per grid step)
    B_pad = _round_up(B8, TB)
    grid = (B_pad // TB,)

    # ---- pad + cast operands in the wrapper --------------------------------
    x_p = _pad2(x, B_pad, L_pad).astype(jnp.bfloat16)

    def wpad(w, rows, cols):
        return _pad2(w, rows, cols).astype(jnp.bfloat16)

    def bpad(b, cols):
        return _pad2(b, 1, cols).astype(jnp.float32)

    # Fuse the two heads: [hidden, obs_dim + z_dim] weight, [1, obs_dim + z_dim] bias.
    wh = jnp.concatenate([params["wo"], params["wa"]], axis=1)
    bh = jnp.concatenate([params["bo"], params["ba"]], axis=1)

    operands = [
        x_p,
        wpad(params["w1"], L_pad, H_pad), bpad(params["b1"], H_pad),
        wpad(params["w2"], H_pad, H_pad), bpad(params["b2"], H_pad),
        wpad(params["w3"], H_pad, H_pad), bpad(params["b3"], H_pad),
        wpad(params["w4"], H_pad, H_pad), bpad(params["b4"], H_pad),
        wpad(params["w5"], H_pad, H_pad), bpad(params["b5"], H_pad),
        wpad(wh, H_pad, O_pad), bpad(bh, O_pad),
    ]

    # ---- BlockSpecs: batch-tiled x/out, grid-invariant weights/biases -------
    x_spec = pl.BlockSpec((TB, L_pad), lambda i: (i, 0))
    out_spec = pl.BlockSpec((TB, O_pad), lambda i: (i, 0))

    def const_spec(arr):
        return pl.BlockSpec(arr.shape, lambda i: (0, 0))

    in_specs = [x_spec] + [const_spec(a) for a in operands[1:]]

    # ---- cost estimate & VMEM budget ----------------------------------------
    flops = 2 * B_pad * (L_pad * H_pad + 4 * H_pad * H_pad + H_pad * O_pad)
    bytes_accessed = sum(int(a.size) * a.dtype.itemsize for a in operands) \
        + B_pad * O_pad * 4
    cost = pl.CostEstimate(flops=flops, transcendentals=0,
                           bytes_accessed=bytes_accessed)

    weight_bytes = sum(int(a.size) * a.dtype.itemsize for a in operands[1:])
    tile_bytes = TB * L_pad * 2 + TB * O_pad * 4
    needed = 2 * (weight_bytes + tile_bytes)               # double-buffered upper bound
    vmem_limit = int(min(max(needed + (4 << 20), 32 << 20), 48 << 20))
    # TODO(synk): for very large hidden_dim (bf16 weights alone > ~40 MiB) add per-layer
    # K/N tiling (emit_pipeline or an extra grid axis) instead of fully resident weights.

    out_padded = pl.pallas_call(
        state_decoder_kernel,
        out_shape=jax.ShapeDtypeStruct((B_pad, O_pad), jnp.float32),
        grid=grid,
        in_specs=in_specs,
        out_specs=out_spec,
        compiler_params=pltpu.CompilerParams(
            dimension_semantics=("parallel",),             # shard batch tiles across TCs (v7x)
            vmem_limit_bytes=vmem_limit,
        ),
        cost_estimate=cost,
    )(*operands)

    return out_padded[:B, :out_dim]


def init_params(key, latent_dim, obs_dim, z_dim, hidden_dim):
    """Deterministic synthetic init. Linear(i, o) -> weight stored as [i, o], bias [1, o]."""
    dims = [
        ("1", latent_dim, hidden_dim),
        ("2", hidden_dim, hidden_dim),
        ("3", hidden_dim, hidden_dim),
        ("4", hidden_dim, hidden_dim),
        ("5", hidden_dim, hidden_dim),
        ("o", hidden_dim, obs_dim),
        ("a", hidden_dim, z_dim),
    ]
    params = {}
    for name, fan_in, fan_out in dims:
        key, kw, kb = jax.random.split(key, 3)
        bound = 1.0 / jnp.sqrt(fan_in)
        params[f"w{name}"] = jax.random.uniform(
            kw, (fan_in, fan_out), jnp.float32, -bound, bound)
        params[f"b{name}"] = jax.random.uniform(
            kb, (1, fan_out), jnp.float32, -bound, bound)
    return params


def reference_forward(x, params):
    """Pure-JAX f32 reference of the PyTorch forward, for correctness checking."""
    h = x
    for name in ["1", "2", "3", "4", "5"]:
        h = jnp.maximum(h @ params[f"w{name}"] + params[f"b{name}"], 0.0)
    out_obs = h @ params["wo"] + params["bo"]
    out_act = h @ params["wa"] + params["ba"]
    return jnp.concatenate([out_obs, out_act], axis=1)


if __name__ == "__main__":
    latent_dim, obs_dim, z_dim, hidden_dim = 8, 6, 4, 32
    batch = 2

    key = jax.random.PRNGKey(0)
    key, kx = jax.random.split(key)
    x = jax.random.normal(kx, (batch, latent_dim), jnp.float32)
    params = init_params(key, latent_dim, obs_dim, z_dim, hidden_dim)

    out = state_decoder_forward(x, params)
    out = jax.block_until_ready(out)

    ref = reference_forward(x, params)
    assert out.shape == (batch, obs_dim + z_dim), out.shape
    # bf16 MXU operands (f32 accumulation) -> relax tolerance vs the f32 reference.
    assert jnp.allclose(out, ref, atol=3e-2, rtol=3e-2), (
        "mismatch vs reference; max abs err = "
        f"{float(jnp.max(jnp.abs(out - ref)))}")

    print("KERNEL_OK")
</pallas_src>

<mosaic_0001>
module attributes {stable_mosaic.version = 11 : i64} {
  func.func @state_decoder_kernel(%arg0: i32, %arg1: memref<8x128xbf16, #tpu.memory_space<vmem>>, %arg2: memref<128x128xbf16, #tpu.memory_space<vmem>>, %arg3: memref<1x128xf32, #tpu.memory_space<vmem>>, %arg4: memref<128x128xbf16, #tpu.memory_space<vmem>>, %arg5: memref<1x128xf32, #tpu.memory_space<vmem>>, %arg6: memref<128x128xbf16, #tpu.memory_space<vmem>>, %arg7: memref<1x128xf32, #tpu.memory_space<vmem>>, %arg8: memref<128x128xbf16, #tpu.memory_space<vmem>>, %arg9: memref<1x128xf32, #tpu.memory_space<vmem>>, %arg10: memref<128x128xbf16, #tpu.memory_space<vmem>>, %arg11: memref<1x128xf32, #tpu.memory_space<vmem>>, %arg12: memref<128x128xbf16, #tpu.memory_space<vmem>>, %arg13: memref<1x128xf32, #tpu.memory_space<vmem>>, %arg14: memref<8x128xf32, #tpu.memory_space<vmem>>) attributes {dimension_semantics = [#tpu.dimension_semantics<parallel>], iteration_bounds = array<i64: 1>, scalar_prefetch = 0 : i64, scratch_operands = 0 : i64, tpu.core_type = #tpu.core_type<tc>, window_params = [{transform_indices = @transform_0, window_bounds = array<i64: 8, 128>}, {pipeline_mode = #tpu.pipeline_mode<synchronous>, transform_indices = @transform_1, window_bounds = array<i64: 128, 128>}, {pipeline_mode = #tpu.pipeline_mode<synchronous>, transform_indices = @transform_2, window_bounds = array<i64: 1, 128>}, {pipeline_mode = #tpu.pipeline_mode<synchronous>, transform_indices = @transform_3, window_bounds = array<i64: 128, 128>}, {pipeline_mode = #tpu.pipeline_mode<synchronous>, transform_indices = @transform_4, window_bounds = array<i64: 1, 128>}, {pipeline_mode = #tpu.pipeline_mode<synchronous>, transform_indices = @transform_5, window_bounds = array<i64: 128, 128>}, {pipeline_mode = #tpu.pipeline_mode<synchronous>, transform_indices = @transform_6, window_bounds = array<i64: 1, 128>}, {pipeline_mode = #tpu.pipeline_mode<synchronous>, transform_indices = @transform_7, window_bounds = array<i64: 128, 128>}, {pipeline_mode = #tpu.pipeline_mode<synchronous>, transform_indices = @transform_8, window_bounds = array<i64: 1, 128>}, {pipeline_mode = #tpu.pipeline_mode<synchronous>, transform_indices = @transform_9, window_bounds = array<i64: 128, 128>}, {pipeline_mode = #tpu.pipeline_mode<synchronous>, transform_indices = @transform_10, window_bounds = array<i64: 1, 128>}, {pipeline_mode = #tpu.pipeline_mode<synchronous>, transform_indices = @transform_11, window_bounds = array<i64: 128, 128>}, {pipeline_mode = #tpu.pipeline_mode<synchronous>, transform_indices = @transform_12, window_bounds = array<i64: 1, 128>}, {transform_indices = @transform_13, window_bounds = array<i64: 8, 128>}]} {
    %c0 = arith.constant 0 : index
    %c0_0 = arith.constant 0 : index
    %0 = vector.load %arg1[%c0, %c0_0] : memref<8x128xbf16, #tpu.memory_space<vmem>>, vector<8x128xbf16>
    %c0_1 = arith.constant 0 : index
    %c0_2 = arith.constant 0 : index
    %1 = vector.load %arg2[%c0_1, %c0_2] : memref<128x128xbf16, #tpu.memory_space<vmem>>, vector<128x128xbf16>
    %cst = arith.constant dense<0.000000e+00> : vector<8x128xf32>
    %2 = tpu.matmul %0, %1, %cst {dimension_numbers = #tpu.dot_dimension_numbers<[1], [0], [0], [1], [0, 0, 1, 1], [], []>} : vector<8x128xbf16>, vector<128x128xbf16>, vector<8x128xf32> -> vector<8x128xf32>
    %c0_3 = arith.constant 0 : index
    %c0_4 = arith.constant 0 : index
    %3 = vector.load %arg3[%c0_3, %c0_4] : memref<1x128xf32, #tpu.memory_space<vmem>>, vector<1x128xf32>
    %4 = vector.broadcast %3 : vector<1x128xf32> to vector<8x128xf32>
    %5 = arith.addf %2, %4 : vector<8x128xf32>
    %cst_5 = arith.constant 0.000000e+00 : f32
    %6 = vector.broadcast %cst_5 : f32 to vector<8x128xf32>
    %7 = arith.maximumf %5, %6 : vector<8x128xf32>
    %8 = arith.truncf %7 : vector<8x128xf32> to vector<8x128xbf16>
    %c0_6 = arith.constant 0 : index
    %c0_7 = arith.constant 0 : index
    %9 = vector.load %arg4[%c0_6, %c0_7] : memref<128x128xbf16, #tpu.memory_space<vmem>>, vector<128x128xbf16>
    %cst_8 = arith.constant dense<0.000000e+00> : vector<8x128xf32>
    %10 = tpu.matmul %8, %9, %cst_8 {dimension_numbers = #tpu.dot_dimension_numbers<[1], [0], [0], [1], [0, 0, 1, 1], [], []>} : vector<8x128xbf16>, vector<128x128xbf16>, vector<8x128xf32> -> vector<8x128xf32>
    %c0_9 = arith.constant 0 : index
    %c0_10 = arith.constant 0 : index
    %11 = vector.load %arg5[%c0_9, %c0_10] : memref<1x128xf32, #tpu.memory_space<vmem>>, vector<1x128xf32>
    %12 = vector.broadcast %11 : vector<1x128xf32> to vector<8x128xf32>
    %13 = arith.addf %10, %12 : vector<8x128xf32>
    %cst_11 = arith.constant 0.000000e+00 : f32
    %14 = vector.broadcast %cst_11 : f32 to vector<8x128xf32>
    %15 = arith.maximumf %13, %14 : vector<8x128xf32>
    %16 = arith.truncf %15 : vector<8x128xf32> to vector<8x128xbf16>
    %c0_12 = arith.constant 0 : index
    %c0_13 = arith.constant 0 : index
    %17 = vector.load %arg6[%c0_12, %c0_13] : memref<128x128xbf16, #tpu.memory_space<vmem>>, vector<128x128xbf16>
    %cst_14 = arith.constant dense<0.000000e+00> : vector<8x128xf32>
    %18 = tpu.matmul %16, %17, %cst_14 {dimension_numbers = #tpu.dot_dimension_numbers<[1], [0], [0], [1], [0, 0, 1, 1], [], []>} : vector<8x128xbf16>, vector<128x128xbf16>, vector<8x128xf32> -> vector<8x128xf32>
    %c0_15 = arith.constant 0 : index
    %c0_16 = arith.constant 0 : index
    %19 = vector.load %arg7[%c0_15, %c0_16] : memref<1x128xf32, #tpu.memory_space<vmem>>, vector<1x128xf32>
    %20 = vector.broadcast %19 : vector<1x128xf32> to vector<8x128xf32>
    %21 = arith.addf %18, %20 : vector<8x128xf32>
    %cst_17 = arith.constant 0.000000e+00 : f32
    %22 = vector.broadcast %cst_17 : f32 to vector<8x128xf32>
    %23 = arith.maximumf %21, %22 : vector<8x128xf32>
    %24 = arith.truncf %23 : vector<8x128xf32> to vector<8x128xbf16>
    %c0_18 = arith.constant 0 : index
    %c0_19 = arith.constant 0 : index
    %25 = vector.load %arg8[%c0_18, %c0_19] : memref<128x128xbf16, #tpu.memory_space<vmem>>, vector<128x128xbf16>
    %cst_20 = arith.constant dense<0.000000e+00> : vector<8x128xf32>
    %26 = tpu.matmul %24, %25, %cst_20 {dimension_numbers = #tpu.dot_dimension_numbers<[1], [0], [0], [1], [0, 0, 1, 1], [], []>} : vector<8x128xbf16>, vector<128x128xbf16>, vector<8x128xf32> -> vector<8x128xf32>
    %c0_21 = arith.constant 0 : index
    %c0_22 = arith.constant 0 : index
    %27 = vector.load %arg9[%c0_21, %c0_22] : memref<1x128xf32, #tpu.memory_space<vmem>>, vector<1x128xf32>
    %28 = vector.broadcast %27 : vector<1x128xf32> to vector<8x128xf32>
    %29 = arith.addf %26, %28 : vector<8x128xf32>
    %cst_23 = arith.constant 0.000000e+00 : f32
    %30 = vector.broadcast %cst_23 : f32 to vector<8x128xf32>
    %31 = arith.maximumf %29, %30 : vector<8x128xf32>
    %32 = arith.truncf %31 : vector<8x128xf32> to vector<8x128xbf16>
    %c0_24 = arith.constant 0 : index
    %c0_25 = arith.constant 0 : index
    %33 = vector.load %arg10[%c0_24, %c0_25] : memref<128x128xbf16, #tpu.memory_space<vmem>>, vector<128x128xbf16>
    %cst_26 = arith.constant dense<0.000000e+00> : vector<8x128xf32>
    %34 = tpu.matmul %32, %33, %cst_26 {dimension_numbers = #tpu.dot_dimension_numbers<[1], [0], [0], [1], [0, 0, 1, 1], [], []>} : vector<8x128xbf16>, vector<128x128xbf16>, vector<8x128xf32> -> vector<8x128xf32>
    %c0_27 = arith.constant 0 : index
    %c0_28 = arith.constant 0 : index
    %35 = vector.load %arg11[%c0_27, %c0_28] : memref<1x128xf32, #tpu.memory_space<vmem>>, vector<1x128xf32>
    %36 = vector.broadcast %35 : vector<1x128xf32> to vector<8x128xf32>
    %37 = arith.addf %34, %36 : vector<8x128xf32>
    %cst_29 = arith.constant 0.000000e+00 : f32
    %38 = vector.broadcast %cst_29 : f32 to vector<8x128xf32>
    %39 = arith.maximumf %37, %38 : vector<8x128xf32>
    %40 = arith.truncf %39 : vector<8x128xf32> to vector<8x128xbf16>
    %c0_30 = arith.constant 0 : index
    %c0_31 = arith.constant 0 : index
    %41 = vector.load %arg12[%c0_30, %c0_31] : memref<128x128xbf16, #tpu.memory_space<vmem>>, vector<128x128xbf16>
    %cst_32 = arith.constant dense<0.000000e+00> : vector<8x128xf32>
    %42 = tpu.matmul %40, %41, %cst_32 {dimension_numbers = #tpu.dot_dimension_numbers<[1], [0], [0], [1], [0, 0, 1, 1], [], []>} : vector<8x128xbf16>, vector<128x128xbf16>, vector<8x128xf32> -> vector<8x128xf32>
    %c0_33 = arith.constant 0 : index
    %c0_34 = arith.constant 0 : index
    %43 = vector.load %arg13[%c0_33, %c0_34] : memref<1x128xf32, #tpu.memory_space<vmem>>, vector<1x128xf32>
    %44 = vector.broadcast %43 : vector<1x128xf32> to vector<8x128xf32>
    %45 = arith.addf %42, %44 : vector<8x128xf32>
    %c0_35 = arith.constant 0 : index
    %c0_36 = arith.constant 0 : index
    %46 = vector.load %arg14[%c0_35, %c0_36] : memref<8x128xf32, #tpu.memory_space<vmem>>, vector<8x128xf32>
    tpu.vector_store %arg14[%c0_35, %c0_36], %45 {strides = array<i32>} : memref<8x128xf32, #tpu.memory_space<vmem>>, vector<8x128xf32>,
    return
  }
  func.func @transform_0(%arg0: i32) -> (i32, i32) {
    %c0_i32 = arith.constant 0 : i32
    %c0_i32_0 = arith.constant 0 : i32
    return %arg0, %c0_i32 : i32, i32
  }
  func.func @transform_1(%arg0: i32) -> (i32, i32) {
    %c0_i32 = arith.constant 0 : i32
    %c0_i32_0 = arith.constant 0 : i32
    %c0_i32_1 = arith.constant 0 : i32
    return %c0_i32, %c0_i32_0 : i32, i32
  }
  func.func @transform_2(%arg0: i32) -> (i32, i32) {
    %c0_i32 = arith.constant 0 : i32
    %c0_i32_0 = arith.constant 0 : i32
    %c0_i32_1 = arith.constant 0 : i32
    return %c0_i32, %c0_i32_0 : i32, i32
  }
  func.func @transform_3(%arg0: i32) -> (i32, i32) {
    %c0_i32 = arith.constant 0 : i32
    %c0_i32_0 = arith.constant 0 : i32
    %c0_i32_1 = arith.constant 0 : i32
    return %c0_i32, %c0_i32_0 : i32, i32
  }
  func.func @transform_4(%arg0: i32) -> (i32, i32) {
    %c0_i32 = arith.constant 0 : i32
    %c0_i32_0 = arith.constant 0 : i32
    %c0_i32_1 = arith.constant 0 : i32
    return %c0_i32, %c0_i32_0 : i32, i32
  }
  func.func @transform_5(%arg0: i32) -> (i32, i32) {
    %c0_i32 = arith.constant 0 : i32
    %c0_i32_0 = arith.constant 0 : i32
    %c0_i32_1 = arith.constant 0 : i32
    return %c0_i32, %c0_i32_0 : i32, i32
  }
  func.func @transform_6(%arg0: i32) -> (i32, i32) {
    %c0_i32 = arith.constant 0 : i32
    %c0_i32_0 = arith.constant 0 : i32
    %c0_i32_1 = arith.constant 0 : i32
    return %c0_i32, %c0_i32_0 : i32, i32
  }
  func.func @transform_7(%arg0: i32) -> (i32, i32) {
    %c0_i32 = arith.constant 0 : i32
    %c0_i32_0 = arith.constant 0 : i32
    %c0_i32_1 = arith.constant 0 : i32
    return %c0_i32, %c0_i32_0 : i32, i32
  }
  func.func @transform_8(%arg0: i32) -> (i32, i32) {
    %c0_i32 = arith.constant 0 : i32
    %c0_i32_0 = arith.constant 0 : i32
    %c0_i32_1 = arith.constant 0 : i32
    return %c0_i32, %c0_i32_0 : i32, i32
  }
  func.func @transform_9(%arg0: i32) -> (i32, i32) {
    %c0_i32 = arith.constant 0 : i32
    %c0_i32_0 = arith.constant 0 : i32
    %c0_i32_1 = arith.constant 0 : i32
    return %c0_i32, %c0_i32_0 : i32, i32
  }
  func.func @transform_10(%arg0: i32) -> (i32, i32) {
    %c0_i32 = arith.constant 0 : i32
    %c0_i32_0 = arith.constant 0 : i32
    %c0_i32_1 = arith.constant 0 : i32
    return %c0_i32, %c0_i32_0 : i32, i32
  }
  func.func @transform_11(%arg0: i32) -> (i32, i32) {
    %c0_i32 = arith.constant 0 : i32
    %c0_i32_0 = arith.constant 0 : i32
    %c0_i32_1 = arith.constant 0 : i32
    return %c0_i32, %c0_i32_0 : i32, i32
  }
  func.func @transform_12(%arg0: i32) -> (i32, i32) {
    %c0_i32 = arith.constant 0 : i32
    %c0_i32_0 = arith.constant 0 : i32
    %c0_i32_1 = arith.constant 0 : i32
    return %c0_i32, %c0_i32_0 : i32, i32
  }
  func.func @transform_13(%arg0: i32) -> (i32, i32) {
    %c0_i32 = arith.constant 0 : i32
    %c0_i32_0 = arith.constant 0 : i32
    return %arg0, %c0_i32 : i32, i32
  }
}

</mosaic_0001>

<llo_original>
// kernel: state_decoder_forward.1
$region0: #{state_decoder_forward.1}
  #allocation0 [shape = 'u32[]', space=smem, size = 0x4, offset = 0x4, fixed_abs, tag = 'smem constant byte address 0x4 - core index']
  #allocation1 [shape = 'u32[144,128]{1,0:T(1,128)}', space=vmem, size = 0x12000, scoped, tag = 'internal scratch']
  %s0 = inlined_call_operand.vmem [shape: bf16[8,128], index: 0, kind: input, shape index: {}]
  %s1 = inlined_call_operand.vmem [shape: bf16[128,128], index: 1, kind: input, shape index: {}]
  %s2 = inlined_call_operand.vmem [shape: f32[1,128], index: 2, kind: input, shape index: {}]
  %s3 = inlined_call_operand.vmem [shape: bf16[128,128], index: 3, kind: input, shape index: {}]
  %s4 = inlined_call_operand.vmem [shape: f32[1,128], index: 4, kind: input, shape index: {}]
  %s5 = inlined_call_operand.vmem [shape: bf16[128,128], index: 5, kind: input, shape index: {}]
  %s6 = inlined_call_operand.vmem [shape: f32[1,128], index: 6, kind: input, shape index: {}]
  %s7 = inlined_call_operand.vmem [shape: bf16[128,128], index: 7, kind: input, shape index: {}]
  %s8 = inlined_call_operand.vmem [shape: f32[1,128], index: 8, kind: input, shape index: {}]
  %s9 = inlined_call_operand.vmem [shape: bf16[128,128], index: 9, kind: input, shape index: {}]
  %s10 = inlined_call_operand.vmem [shape: f32[1,128], index: 10, kind: input, shape index: {}]
  %s11 = inlined_call_operand.vmem [shape: bf16[128,128], index: 11, kind: input, shape index: {}]
  %s12 = inlined_call_operand.vmem [shape: f32[1,128], index: 12, kind: input, shape index: {}]
  %s13 = inlined_call_operand.vmem [shape: f32[8,128], index: 13, kind: output, shape index: {}]
  %s14 = sld [smem:[#allocation0]]
  $region62: #{state_decoder_forward.1} parent=0
    _
  %s16 = ssub.s32 1, %s14
  %s17 = scalar_select 0, %s16, %s14
  // Predicated region
  $region2: #{state_decoder_forward.1} parent=0 // pred_check
    _
  $region3: #{state_decoder_forward.1} parent=0 // pred_check_branch
    %19 = sbr.rel (0) target = $region5
  $region4: #{state_decoder_forward.1} parent=0 // pred_region
    _
  $region5: #{state_decoder_forward.1} parent=0 // pred_fallthru
    _
  // Predicated region
  $region6: #{state_decoder_forward.1} parent=0 // pred_check
    _
  $region7: #{state_decoder_forward.1} parent=0 // pred_check_branch
    %21 = sbr.rel (0) target = $region9
  $region8: #{state_decoder_forward.1} parent=0 // pred_region
    _
  $region9: #{state_decoder_forward.1} parent=0 // pred_fallthru
    _
  // Predicated region
  $region10: #{state_decoder_forward.1} parent=0 // pred_check
    _
  $region11: #{state_decoder_forward.1} parent=0 // pred_check_branch
    %23 = sbr.rel (0) target = $region13
  $region12: #{state_decoder_forward.1} parent=0 // pred_region
    _
  $region13: #{state_decoder_forward.1} parent=0 // pred_fallthru
    _
  // Predicated region
  $region14: #{state_decoder_forward.1} parent=0 // pred_check
    _
  $region15: #{state_decoder_forward.1} parent=0 // pred_check_branch
    %25 = sbr.rel (0) target = $region17
  $region16: #{state_decoder_forward.1} parent=0 // pred_region
    _
  $region17: #{state_decoder_forward.1} parent=0 // pred_fallthru
    _
  // Predicated region
  $region18: #{state_decoder_forward.1} parent=0 // pred_check
    _
  $region19: #{state_decoder_forward.1} parent=0 // pred_check_branch
    %27 = sbr.rel (0) target = $region21
  $region20: #{state_decoder_forward.1} parent=0 // pred_region
    _
  $region21: #{state_decoder_forward.1} parent=0 // pred_fallthru
    _
  // Predicated region
  $region22: #{state_decoder_forward.1} parent=0 // pred_check
    _
  $region23: #{state_decoder_forward.1} parent=0 // pred_check_branch
    %29 = sbr.rel (0) target = $region25
  $region24: #{state_decoder_forward.1} parent=0 // pred_region
    _
  $region25: #{state_decoder_forward.1} parent=0 // pred_fallthru
    _
  // Predicated region
  $region26: #{state_decoder_forward.1} parent=0 // pred_check
    _
  $region27: #{state_decoder_forward.1} parent=0 // pred_check_branch
    %31 = sbr.rel (0) target = $region29
  $region28: #{state_decoder_forward.1} parent=0 // pred_region
    _
  $region29: #{state_decoder_forward.1} parent=0 // pred_fallthru
    _
  // Predicated region
  $region30: #{state_decoder_forward.1} parent=0 // pred_check
    _
  $region31: #{state_decoder_forward.1} parent=0 // pred_check_branch
    %33 = sbr.rel (0) target = $region33
  $region32: #{state_decoder_forward.1} parent=0 // pred_region
    _
  $region33: #{state_decoder_forward.1} parent=0 // pred_fallthru
    _
  // Predicated region
  $region34: #{state_decoder_forward.1} parent=0 // pred_check
    _
  $region35: #{state_decoder_forward.1} parent=0 // pred_check_branch
    %35 = sbr.rel (0) target = $region37
  $region36: #{state_decoder_forward.1} parent=0 // pred_region
    _
  $region37: #{state_decoder_forward.1} parent=0 // pred_fallthru
    _
  // Predicated region
  $region38: #{state_decoder_forward.1} parent=0 // pred_check
    _
  $region39: #{state_decoder_forward.1} parent=0 // pred_check_branch
    %37 = sbr.rel (0) target = $region41
  $region40: #{state_decoder_forward.1} parent=0 // pred_region
    _
  $region41: #{state_decoder_forward.1} parent=0 // pred_fallthru
    _
  // Predicated region
  $region42: #{state_decoder_forward.1} parent=0 // pred_check
    _
  $region43: #{state_decoder_forward.1} parent=0 // pred_check_branch
    %39 = sbr.rel (0) target = $region45
  $region44: #{state_decoder_forward.1} parent=0 // pred_region
    _
  $region45: #{state_decoder_forward.1} parent=0 // pred_fallthru
    _
  // Predicated region
  $region46: #{state_decoder_forward.1} parent=0 // pred_check
    _
  $region47: #{state_decoder_forward.1} parent=0 // pred_check_branch
    %41 = sbr.rel (0) target = $region49
  $region48: #{state_decoder_forward.1} parent=0 // pred_region
    _
  $region49: #{state_decoder_forward.1} parent=0 // pred_fallthru
    _
  // Predicated region
  $region50: #{state_decoder_forward.1} parent=0 // pred_check
    _
  $region51: #{state_decoder_forward.1} parent=0 // pred_check_branch
    %43 = sbr.rel (0) target = $region53
  $region52: #{state_decoder_forward.1} parent=0 // pred_region
    _
  $region53: #{state_decoder_forward.1} parent=0 // pred_fallthru
    _
  %v45 = vld [vmem:[%s0] sm:$0xf]
  %v46 = vld [vmem:[%s1] sm:$0xf]
  %v47 = vld [vmem:[%s1 + $0x4] sm:$0xf]
  %v48 = vld [vmem:[%s1 + $0x8] sm:$0xf]
  %v49 = vld [vmem:[%s1 + $0xc] sm:$0xf]
  %v50 = vld [vmem:[%s1 + $0x10] sm:$0xf]
  %v51 = vld [vmem:[%s1 + $0x14] sm:$0xf]
  %v52 = vld [vmem:[%s1 + $0x18] sm:$0xf]
  %v53 = vld [vmem:[%s1 + $0x1c] sm:$0xf]
  %v54 = vld [vmem:[%s1 + $0x20] sm:$0xf]
  %v55 = vld [vmem:[%s1 + $0x24] sm:$0xf]
  %v56 = vld [vmem:[%s1 + $0x28] sm:$0xf]
  %v57 = vld [vmem:[%s1 + $0x2c] sm:$0xf]
  %v58 = vld [vmem:[%s1 + $0x30] sm:$0xf]
  %v59 = vld [vmem:[%s1 + $0x34] sm:$0xf]
  %v60 = vld [vmem:[%s1 + $0x38] sm:$0xf]
  %v61 = vld [vmem:[%s1 + $0x3c] sm:$0xf]
  %v62 = vld [vmem:[%s2] sm:$0x1]
  %v64 = vlaneseq
  %v65 = vshrl.u32 %v64, 7
  %v66 = vsub.s32 0, %v65
  %v67 = vrot.slane %v62, %v66
  %v85 = vunpack.c.l.b16 %v46
  %v86 = vunpack.c.l.b16 %v47
  %v87 = vunpack.c.l.b16 %v48
  %v88 = vunpack.c.l.b16 %v49
  %v89 = vunpack.c.l.b16 %v50
  %v90 = vunpack.c.l.b16 %v51
  %v91 = vunpack.c.l.b16 %v52
  %v92 = vunpack.c.l.b16 %v53
  %v93 = vunpack.c.l.b16 %v54
  %v94 = vunpack.c.l.b16 %v55
  %v95 = vunpack.c.l.b16 %v56
  %v96 = vunpack.c.l.b16 %v57
  %v97 = vunpack.c.l.b16 %v58
  %v98 = vunpack.c.l.b16 %v59
  %v99 = vunpack.c.l.b16 %v60
  %v100 = vunpack.c.l.b16 %v61
  %v101 = vpack.c.b16 %v86, %v85
  %v102 = vpack.c.b16 %v88, %v87
  %v103 = vpack.c.b16 %v90, %v89
  %v104 = vpack.c.b16 %v92, %v91
  %v105 = vpack.c.b16 %v94, %v93
  %v106 = vpack.c.b16 %v96, %v95
  %v107 = vpack.c.b16 %v98, %v97
  %v108 = vpack.c.b16 %v100, %v99
  %117 = vmatprep.subr.bf16.mxu0 0
  %118 = vmatpush1.bf16.msra.mxu0 %v101
  %119 = vmatprep.subr.bf16.mxu0 0
  %120 = vmatpush1.bf16.msra.mxu0 %v102
  %121 = vmatprep.subr.bf16.mxu0 0
  %122 = vmatpush1.bf16.msra.mxu0 %v103
  %123 = vmatprep.subr.bf16.mxu0 0
  %124 = vmatpush1.bf16.msra.mxu0 %v104
  %125 = vmatprep.subr.bf16.mxu0 0
  %126 = vmatpush1.bf16.msra.mxu0 %v105
  %127 = vmatprep.subr.bf16.mxu0 0
  %128 = vmatpush1.bf16.msra.mxu0 %v106
  %129 = vmatprep.subr.bf16.mxu0 0
  %130 = vmatpush1.bf16.msra.mxu0 %v107
  %131 = vmatprep.subr.bf16.mxu0 0
  %132 = vmatpush1.bf16.msra.mxu0 %v108
  %133 = vmatprep.subr.bf16.mxu0 0
  %134 = vmatpush1.bf16.msra.mxu0 0
  %135 = vmatprep.subr.bf16.mxu0 0
  %136 = vmatpush1.bf16.msra.mxu0 0
  %137 = vmatprep.subr.bf16.mxu0 0
  %138 = vmatpush1.bf16.msra.mxu0 0
  %139 = vmatprep.subr.bf16.mxu0 0
  %140 = vmatpush1.bf16.msra.mxu0 0
  %141 = vmatprep.subr.bf16.mxu0 0
  %142 = vmatpush1.bf16.msra.mxu0 0
  %143 = vmatprep.subr.bf16.mxu0 0
  %144 = vmatpush1.bf16.msra.mxu0 0
  %145 = vmatprep.subr.bf16.mxu0 0
  %146 = vmatpush1.bf16.msra.mxu0 0
  %147 = vmatprep.subr.bf16.mxu0 0
  %148 = vmatpush1.bf16.msra.mxu0 0
  %149 = vmatprep.mubr.bf16.mxu0 0
  %150 = vmatmul.mubr.bf16.gmra.mrb[0].mxu0 %v45
  %v151 = vpop.f32.mrb[0].mxu0
  %v152 = vadd.f32 %v67, %v151
  %v153 = vpop.f32.mrb[0].mxu0
  %v154 = vpop.f32.mrb[0].mxu0
  %v155 = vpop.f32.mrb[0].mxu0
  %156 = vdwg.mxu0
  %v157 = vmax.f32 %v152, 0.0
  %v158 = vpack.c.bf16 %v157, %v157
  %v159 = vld [vmem:[%s3] sm:$0xf]
  %v160 = vld [vmem:[%s3 + $0x4] sm:$0xf]
  %v161 = vld [vmem:[%s3 + $0x8] sm:$0xf]
  %v162 = vld [vmem:[%s3 + $0xc] sm:$0xf]
  %v163 = vld [vmem:[%s3 + $0x10] sm:$0xf]
  %v164 = vld [vmem:[%s3 + $0x14] sm:$0xf]
  %v165 = vld [vmem:[%s3 + $0x18] sm:$0xf]
  %v166 = vld [vmem:[%s3 + $0x1c] sm:$0xf]
  %v167 = vld [vmem:[%s3 + $0x20] sm:$0xf]
  %v168 = vld [vmem:[%s3 + $0x24] sm:$0xf]
  %v169 = vld [vmem:[%s3 + $0x28] sm:$0xf]
  %v170 = vld [vmem:[%s3 + $0x2c] sm:$0xf]
  %v171 = vld [vmem:[%s3 + $0x30] sm:$0xf]
  %v172 = vld [vmem:[%s3 + $0x34] sm:$0xf]
  %v173 = vld [vmem:[%s3 + $0x38] sm:$0xf]
  %v174 = vld [vmem:[%s3 + $0x3c] sm:$0xf]
  %v175 = vld [vmem:[%s4] sm:$0x1]
  %v177 = vlaneseq
  %v178 = vshrl.u32 %v177, 7
  %v179 = vsub.s32 0, %v178
  %v180 = vrot.slane %v175, %v179
  %v198 = vunpack.c.l.b16 %v159
  %v199 = vunpack.c.l.b16 %v160
  %v200 = vunpack.c.l.b16 %v161
  %v201 = vunpack.c.l.b16 %v162
  %v202 = vunpack.c.l.b16 %v163
  %v203 = vunpack.c.l.b16 %v164
  %v204 = vunpack.c.l.b16 %v165
  %v205 = vunpack.c.l.b16 %v166
  %v206 = vunpack.c.l.b16 %v167
  %v207 = vunpack.c.l.b16 %v168
  %v208 = vunpack.c.l.b16 %v169
  %v209 = vunpack.c.l.b16 %v170
  %v210 = vunpack.c.l.b16 %v171
  %v211 = vunpack.c.l.b16 %v172
  %v212 = vunpack.c.l.b16 %v173
  %v213 = vunpack.c.l.b16 %v174
  %v214 = vpack.c.b16 %v199, %v198
  %v215 = vpack.c.b16 %v201, %v200
  %v216 = vpack.c.b16 %v203, %v202
  %v217 = vpack.c.b16 %v205, %v204
  %v218 = vpack.c.b16 %v207, %v206
  %v219 = vpack.c.b16 %v209, %v208
  %v220 = vpack.c.b16 %v211, %v210
  %v221 = vpack.c.b16 %v213, %v212
  %230 = vmatprep.subr.bf16.mxu0 0
  %231 = vmatpush1.bf16.msra.mxu0 %v214
  %232 = vmatprep.subr.bf16.mxu0 0
  %233 = vmatpush1.bf16.msra.mxu0 %v215
  %234 = vmatprep.subr.bf16.mxu0 0
  %235 = vmatpush1.bf16.msra.mxu0 %v216
  %236 = vmatprep.subr.bf16.mxu0 0
  %237 = vmatpush1.bf16.msra.mxu0 %v217
  %238 = vmatprep.subr.bf16.mxu0 0
  %239 = vmatpush1.bf16.msra.mxu0 %v218
  %240 = vmatprep.subr.bf16.mxu0 0
  %241 = vmatpush1.bf16.msra.mxu0 %v219
  %242 = vmatprep.subr.bf16.mxu0 0
  %243 = vmatpush1.bf16.msra.mxu0 %v220
  %244 = vmatprep.subr.bf16.mxu0 0
  %245 = vmatpush1.bf16.msra.mxu0 %v221
  %246 = vmatprep.subr.bf16.mxu0 0
  %247 = vmatpush1.bf16.msra.mxu0 0
  %248 = vmatprep.subr.bf16.mxu0 0
  %249 = vmatpush1.bf16.msra.mxu0 0
  %250 = vmatprep.subr.bf16.mxu0 0
  %251 = vmatpush1.bf16.msra.mxu0 0
  %252 = vmatprep.subr.bf16.mxu0 0
  %253 = vmatpush1.bf16.msra.mxu0 0
  %254 = vmatprep.subr.bf16.mxu0 0
  %255 = vmatpush1.bf16.msra.mxu0 0
  %256 = vmatprep.subr.bf16.mxu0 0
  %257 = vmatpush1.bf16.msra.mxu0 0
  %258 = vmatprep.subr.bf16.mxu0 0
  %259 = vmatpush1.bf16.msra.mxu0 0
  %260 = vmatprep.subr.bf16.mxu0 0
  %261 = vmatpush1.bf16.msra.mxu0 0
  %262 = vmatprep.mubr.bf16.mxu0 0
  %263 = vmatmul.mubr.bf16.gmra.mrb[0].mxu0 %v158
  %v264 = vpop.f32.mrb[0].mxu0
  %v265 = vadd.f32 %v180, %v264
  %v266 = vpop.f32.mrb[0].mxu0
  %v267 = vpop.f32.mrb[0].mxu0
  %v268 = vpop.f32.mrb[0].mxu0
  %269 = vdwg.mxu0
  %v270 = vmax.f32 %v265, 0.0
  %v271 = vpack.c.bf16 %v270, %v270
  %v272 = vld [vmem:[%s5] sm:$0xf]
  %v273 = vld [vmem:[%s5 + $0x4] sm:$0xf]
  %v274 = vld [vmem:[%s5 + $0x8] sm:$0xf]
  %v275 = vld [vmem:[%s5 + $0xc] sm:$0xf]
  %v276 = vld [vmem:[%s5 + $0x10] sm:$0xf]
  %v277 = vld [vmem:[%s5 + $0x14] sm:$0xf]
  %v278 = vld [vmem:[%s5 + $0x18] sm:$0xf]
  %v279 = vld [vmem:[%s5 + $0x1c] sm:$0xf]
  %v280 = vld [vmem:[%s5 + $0x20] sm:$0xf]
  %v281 = vld [vmem:[%s5 + $0x24] sm:$0xf]
  %v282 = vld [vmem:[%s5 + $0x28] sm:$0xf]
  %v283 = vld [vmem:[%s5 + $0x2c] sm:$0xf]
  %v284 = vld [vmem:[%s5 + $0x30] sm:$0xf]
  %v285 = vld [vmem:[%s5 + $0x34] sm:$0xf]
  %v286 = vld [vmem:[%s5 + $0x38] sm:$0xf]
  %v287 = vld [vmem:[%s5 + $0x3c] sm:$0xf]
  %v288 = vld [vmem:[%s6] sm:$0x1]
  %v290 = vlaneseq
  %v291 = vshrl.u32 %v290, 7
  %v292 = vsub.s32 0, %v291
  %v293 = vrot.slane %v288, %v292
  %v311 = vunpack.c.l.b16 %v272
  %v312 = vunpack.c.l.b16 %v273
  %v313 = vunpack.c.l.b16 %v274
  %v314 = vunpack.c.l.b16 %v275
  %v315 = vunpack.c.l.b16 %v276
  %v316 = vunpack.c.l.b16 %v277
  %v317 = vunpack.c.l.b16 %v278
  %v318 = vunpack.c.l.b16 %v279
  %v319 = vunpack.c.l.b16 %v280
  %v320 = vunpack.c.l.b16 %v281
  %v321 = vunpack.c.l.b16 %v282
  %v322 = vunpack.c.l.b16 %v283
  %v323 = vunpack.c.l.b16 %v284
  %v324 = vunpack.c.l.b16 %v285
  %v325 = vunpack.c.l.b16 %v286
  %v326 = vunpack.c.l.b16 %v287
  %v327 = vpack.c.b16 %v312, %v311
  %v328 = vpack.c.b16 %v314, %v313
  %v329 = vpack.c.b16 %v316, %v315
  %v330 = vpack.c.b16 %v318, %v317
  %v331 = vpack.c.b16 %v320, %v319
  %v332 = vpack.c.b16 %v322, %v321
  %v333 = vpack.c.b16 %v324, %v323
  %v334 = vpack.c.b16 %v326, %v325
  %343 = vmatprep.subr.bf16.mxu0 0
  %344 = vmatpush1.bf16.msra.mxu0 %v327
  %345 = vmatprep.subr.bf16.mxu0 0
  %346 = vmatpush1.bf16.msra.mxu0 %v328
  %347 = vmatprep.subr.bf16.mxu0 0
  %348 = vmatpush1.bf16.msra.mxu0 %v329
  %349 = vmatprep.subr.bf16.mxu0 0
  %350 = vmatpush1.bf16.msra.mxu0 %v330
  %351 = vmatprep.subr.bf16.mxu0 0
  %352 = vmatpush1.bf16.msra.mxu0 %v331
  %353 = vmatprep.subr.bf16.mxu0 0
  %354 = vmatpush1.bf16.msra.mxu0 %v332
  %355 = vmatprep.subr.bf16.mxu0 0
  %356 = vmatpush1.bf16.msra.mxu0 %v333
  %357 = vmatprep.subr.bf16.mxu0 0
  %358 = vmatpush1.bf16.msra.mxu0 %v334
  %359 = vmatprep.subr.bf16.mxu0 0
  %360 = vmatpush1.bf16.msra.mxu0 0
  %361 = vmatprep.subr.bf16.mxu0 0
  %362 = vmatpush1.bf16.msra.mxu0 0
  %363 = vmatprep.subr.bf16.mxu0 0
  %364 = vmatpush1.bf16.msra.mxu0 0
  %365 = vmatprep.subr.bf16.mxu0 0
  %366 = vmatpush1.bf16.msra.mxu0 0
  %367 = vmatprep.subr.bf16.mxu0 0
  %368 = vmatpush1.bf16.msra.mxu0 0
  %369 = vmatprep.subr.bf16.mxu0 0
  %370 = vmatpush1.bf16.msra.mxu0 0
  %371 = vmatprep.subr.bf16.mxu0 0
  %372 = vmatpush1.bf16.msra.mxu0 0
  %373 = vmatprep.subr.bf16.mxu0 0
  %374 = vmatpush1.bf16.msra.mxu0 0
  %375 = vmatprep.mubr.bf16.mxu0 0
  %376 = vmatmul.mubr.bf16.gmra.mrb[0].mxu0 %v271
  %v377 = vpop.f32.mrb[0].mxu0
  %v378 = vadd.f32 %v293, %v377
  %v379 = vpop.f32.mrb[0].mxu0
  %v380 = vpop.f32.mrb[0].mxu0
  %v381 = vpop.f32.mrb[0].mxu0
  %382 = vdwg.mxu0
  %v383 = vmax.f32 %v378, 0.0
  %v384 = vpack.c.bf16 %v383, %v383
  %v385 = vld [vmem:[%s7] sm:$0xf]
  %v386 = vld [vmem:[%s7 + $0x4] sm:$0xf]
  %v387 = vld [vmem:[%s7 + $0x8] sm:$0xf]
  %v388 = vld [vmem:[%s7 + $0xc] sm:$0xf]
  %v389 = vld [vmem:[%s7 + $0x10] sm:$0xf]
  %v390 = vld [vmem:[%s7 + $0x14] sm:$0xf]
  %v391 = vld [vmem:[%s7 + $0x18] sm:$0xf]
  %v392 = vld [vmem:[%s7 + $0x1c] sm:$0xf]
  %v393 = vld [vmem:[%s7 + $0x20] sm:$0xf]
  %v394 = vld [vmem:[%s7 + $0x24] sm:$0xf]
  %v395 = vld [vmem:[%s7 + $0x28] sm:$0xf]
  %v396 = vld [vmem:[%s7 + $0x2c] sm:$0xf]
  %v397 = vld [vmem:[%s7 + $0x30] sm:$0xf]
  %v398 = vld [vmem:[%s7 + $0x34] sm:$0xf]
  %v399 = vld [vmem:[%s7 + $0x38] sm:$0xf]
  %v400 = vld [vmem:[%s7 + $0x3c] sm:$0xf]
  %v401 = vld [vmem:[%s8] sm:$0x1]
  %v403 = vlaneseq
  %v404 = vshrl.u32 %v403, 7
  %v405 = vsub.s32 0, %v404
  %v406 = vrot.slane %v401, %v405
  %v424 = vunpack.c.l.b16 %v385
  %v425 = vunpack.c.l.b16 %v386
  %v426 = vunpack.c.l.b16 %v387
  %v427 = vunpack.c.l.b16 %v388
  %v428 = vunpack.c.l.b16 %v389
  %v429 = vunpack.c.l.b16 %v390
  %v430 = vunpack.c.l.b16 %v391
  %v431 = vunpack.c.l.b16 %v392
  %v432 = vunpack.c.l.b16 %v393
  %v433 = vunpack.c.l.b16 %v394
  %v434 = vunpack.c.l.b16 %v395
  %v435 = vunpack.c.l.b16 %v396
  %v436 = vunpack.c.l.b16 %v397
  %v437 = vunpack.c.l.b16 %v398
  %v438 = vunpack.c.l.b16 %v399
  %v439 = vunpack.c.l.b16 %v400
  %v440 = vpack.c.b16 %v425, %v424
  %v441 = vpack.c.b16 %v427, %v426
  %v442 = vpack.c.b16 %v429, %v428
  %v443 = vpack.c.b16 %v431, %v430
  %v444 = vpack.c.b16 %v433, %v432
  %v445 = vpack.c.b16 %v435, %v434
  %v446 = vpack.c.b16 %v437, %v436
  %v447 = vpack.c.b16 %v439, %v438
  %456 = vmatprep.subr.bf16.mxu0 0
  %457 = vmatpush1.bf16.msra.mxu0 %v440
  %458 = vmatprep.subr.bf16.mxu0 0
  %459 = vmatpush1.bf16.msra.mxu0 %v441
  %460 = vmatprep.subr.bf16.mxu0 0
  %461 = vmatpush1.bf16.msra.mxu0 %v442
  %462 = vmatprep.subr.bf16.mxu0 0
  %463 = vmatpush1.bf16.msra.mxu0 %v443
  %464 = vmatprep.subr.bf16.mxu0 0
  %465 = vmatpush1.bf16.msra.mxu0 %v444
  %466 = vmatprep.subr.bf16.mxu0 0
  %467 = vmatpush1.bf16.msra.mxu0 %v445
  %468 = vmatprep.subr.bf16.mxu0 0
  %469 = vmatpush1.bf16.msra.mxu0 %v446
  %470 = vmatprep.subr.bf16.mxu0 0
  %471 = vmatpush1.bf16.msra.mxu0 %v447
  %472 = vmatprep.subr.bf16.mxu0 0
  %473 = vmatpush1.bf16.msra.mxu0 0
  %474 = vmatprep.subr.bf16.mxu0 0
  %475 = vmatpush1.bf16.msra.mxu0 0
  %476 = vmatprep.subr.bf16.mxu0 0
  %477 = vmatpush1.bf16.msra.mxu0 0
  %478 = vmatprep.subr.bf16.mxu0 0
  %479 = vmatpush1.bf16.msra.mxu0 0
  %480 = vmatprep.subr.bf16.mxu0 0
  %481 = vmatpush1.bf16.msra.mxu0 0
  %482 = vmatprep.subr.bf16.mxu0 0
  %483 = vmatpush1.bf16.msra.mxu0 0
  %484 = vmatprep.subr.bf16.mxu0 0
  %485 = vmatpush1.bf16.msra.mxu0 0
  %486 = vmatprep.subr.bf16.mxu0 0
  %487 = vmatpush1.bf16.msra.mxu0 0
  %488 = vmatprep.mubr.bf16.mxu0 0
  %489 = vmatmul.mubr.bf16.gmra.mrb[0].mxu0 %v384
  %v490 = vpop.f32.mrb[0].mxu0
  %v491 = vadd.f32 %v406, %v490
  %v492 = vpop.f32.mrb[0].mxu0
  %v493 = vpop.f32.mrb[0].mxu0
  %v494 = vpop.f32.mrb[0].mxu0
  %495 = vdwg.mxu0
  %v496 = vmax.f32 %v491, 0.0
  %v497 = vpack.c.bf16 %v496, %v496
  %v498 = vld [vmem:[%s9] sm:$0xf]
  %v499 = vld [vmem:[%s9 + $0x4] sm:$0xf]
  %v500 = vld [vmem:[%s9 + $0x8] sm:$0xf]
  %v501 = vld [vmem:[%s9 + $0xc] sm:$0xf]
  %v502 = vld [vmem:[%s9 + $0x10] sm:$0xf]
  %v503 = vld [vmem:[%s9 + $0x14] sm:$0xf]
  %v504 = vld [vmem:[%s9 + $0x18] sm:$0xf]
  %v505 = vld [vmem:[%s9 + $0x1c] sm:$0xf]
  %v506 = vld [vmem:[%s9 + $0x20] sm:$0xf]
  %v507 = vld [vmem:[%s9 + $0x24] sm:$0xf]
  %v508 = vld [vmem:[%s9 + $0x28] sm:$0xf]
  %v509 = vld [vmem:[%s9 + $0x2c] sm:$0xf]
  %v510 = vld [vmem:[%s9 + $0x30] sm:$0xf]
  %v511 = vld [vmem:[%s9 + $0x34] sm:$0xf]
  %v512 = vld [vmem:[%s9 + $0x38] sm:$0xf]
  %v513 = vld [vmem:[%s9 + $0x3c] sm:$0xf]
  %v514 = vld [vmem:[%s10] sm:$0x1]
  %v516 = vlaneseq
  %v517 = vshrl.u32 %v516, 7
  %v518 = vsub.s32 0, %v517
  %v519 = vrot.slane %v514, %v518
  %v537 = vunpack.c.l.b16 %v498
  %v538 = vunpack.c.l.b16 %v499
  %v539 = vunpack.c.l.b16 %v500
  %v540 = vunpack.c.l.b16 %v501
  %v541 = vunpack.c.l.b16 %v502
  %v542 = vunpack.c.l.b16 %v503
  %v543 = vunpack.c.l.b16 %v504
  %v544 = vunpack.c.l.b16 %v505
  %v545 = vunpack.c.l.b16 %v506
  %v546 = vunpack.c.l.b16 %v507
  %v547 = vunpack.c.l.b16 %v508
  %v548 = vunpack.c.l.b16 %v509
  %v549 = vunpack.c.l.b16 %v510
  %v550 = vunpack.c.l.b16 %v511
  %v551 = vunpack.c.l.b16 %v512
  %v552 = vunpack.c.l.b16 %v513
  %v553 = vpack.c.b16 %v538, %v537
  %v554 = vpack.c.b16 %v540, %v539
  %v555 = vpack.c.b16 %v542, %v541
  %v556 = vpack.c.b16 %v544, %v543
  %v557 = vpack.c.b16 %v546, %v545
  %v558 = vpack.c.b16 %v548, %v547
  %v559 = vpack.c.b16 %v550, %v549
  %v560 = vpack.c.b16 %v552, %v551
  %569 = vmatprep.subr.bf16.mxu0 0
  %570 = vmatpush1.bf16.msra.mxu0 %v553
  %571 = vmatprep.subr.bf16.mxu0 0
  %572 = vmatpush1.bf16.msra.mxu0 %v554
  %573 = vmatprep.subr.bf16.mxu0 0
  %574 = vmatpush1.bf16.msra.mxu0 %v555
  %575 = vmatprep.subr.bf16.mxu0 0
  %576 = vmatpush1.bf16.msra.mxu0 %v556
  %577 = vmatprep.subr.bf16.mxu0 0
  %578 = vmatpush1.bf16.msra.mxu0 %v557
  %579 = vmatprep.subr.bf16.mxu0 0
  %580 = vmatpush1.bf16.msra.mxu0 %v558
  %581 = vmatprep.subr.bf16.mxu0 0
  %582 = vmatpush1.bf16.msra.mxu0 %v559
  %583 = vmatprep.subr.bf16.mxu0 0
  %584 = vmatpush1.bf16.msra.mxu0 %v560
  %585 = vmatprep.subr.bf16.mxu0 0
  %586 = vmatpush1.bf16.msra.mxu0 0
  %587 = vmatprep.subr.bf16.mxu0 0
  %588 = vmatpush1.bf16.msra.mxu0 0
  %589 = vmatprep.subr.bf16.mxu0 0
  %590 = vmatpush1.bf16.msra.mxu0 0
  %591 = vmatprep.subr.bf16.mxu0 0
  %592 = vmatpush1.bf16.msra.mxu0 0
  %593 = vmatprep.subr.bf16.mxu0 0
  %594 = vmatpush1.bf16.msra.mxu0 0
  %595 = vmatprep.subr.bf16.mxu0 0
  %596 = vmatpush1.bf16.msra.mxu0 0
  %597 = vmatprep.subr.bf16.mxu0 0
  %598 = vmatpush1.bf16.msra.mxu0 0
  %599 = vmatprep.subr.bf16.mxu0 0
  %600 = vmatpush1.bf16.msra.mxu0 0
  %601 = vmatprep.mubr.bf16.mxu0 0
  %602 = vmatmul.mubr.bf16.gmra.mrb[0].mxu0 %v497
  %v603 = vpop.f32.mrb[0].mxu0
  %v604 = vadd.f32 %v519, %v603
  %v605 = vpop.f32.mrb[0].mxu0
  %v606 = vpop.f32.mrb[0].mxu0
  %v607 = vpop.f32.mrb[0].mxu0
  %608 = vdwg.mxu0
  %v609 = vmax.f32 %v604, 0.0
  %v610 = vpack.c.bf16 %v609, %v609
  %v611 = vld [vmem:[%s11] sm:$0xf]
  %v612 = vld [vmem:[%s11 + $0x4] sm:$0xf]
  %v613 = vld [vmem:[%s11 + $0x8] sm:$0xf]
  %v614 = vld [vmem:[%s11 + $0xc] sm:$0xf]
  %v615 = vld [vmem:[%s11 + $0x10] sm:$0xf]
  %v616 = vld [vmem:[%s11 + $0x14] sm:$0xf]
  %v617 = vld [vmem:[%s11 + $0x18] sm:$0xf]
  %v618 = vld [vmem:[%s11 + $0x1c] sm:$0xf]
  %v619 = vld [vmem:[%s11 + $0x20] sm:$0xf]
  %v620 = vld [vmem:[%s11 + $0x24] sm:$0xf]
  %v621 = vld [vmem:[%s11 + $0x28] sm:$0xf]
  %v622 = vld [vmem:[%s11 + $0x2c] sm:$0xf]
  %v623 = vld [vmem:[%s11 + $0x30] sm:$0xf]
  %v624 = vld [vmem:[%s11 + $0x34] sm:$0xf]
  %v625 = vld [vmem:[%s11 + $0x38] sm:$0xf]
  %v626 = vld [vmem:[%s11 + $0x3c] sm:$0xf]
  %v627 = vld [vmem:[%s12] sm:$0x1]
  %v629 = vlaneseq
  %v630 = vshrl.u32 %v629, 7
  %v631 = vsub.s32 0, %v630
  %v632 = vrot.slane %v627, %v631
  %v650 = vunpack.c.l.b16 %v611
  %v651 = vunpack.c.l.b16 %v612
  %v652 = vunpack.c.l.b16 %v613
  %v653 = vunpack.c.l.b16 %v614
  %v654 = vunpack.c.l.b16 %v615
  %v655 = vunpack.c.l.b16 %v616
  %v656 = vunpack.c.l.b16 %v617
  %v657 = vunpack.c.l.b16 %v618
  %v658 = vunpack.c.l.b16 %v619
  %v659 = vunpack.c.l.b16 %v620
  %v660 = vunpack.c.l.b16 %v621
  %v661 = vunpack.c.l.b16 %v622
  %v662 = vunpack.c.l.b16 %v623
  %v663 = vunpack.c.l.b16 %v624
  %v664 = vunpack.c.l.b16 %v625
  %v665 = vunpack.c.l.b16 %v626
  %v666 = vpack.c.b16 %v651, %v650
  %v667 = vpack.c.b16 %v653, %v652
  %v668 = vpack.c.b16 %v655, %v654
  %v669 = vpack.c.b16 %v657, %v656
  %v670 = vpack.c.b16 %v659, %v658
  %v671 = vpack.c.b16 %v661, %v660
  %v672 = vpack.c.b16 %v663, %v662
  %v673 = vpack.c.b16 %v665, %v664
  %682 = vmatprep.subr.bf16.mxu0 0
  %683 = vmatpush1.bf16.msra.mxu0 %v666
  %684 = vmatprep.subr.bf16.mxu0 0
  %685 = vmatpush1.bf16.msra.mxu0 %v667
  %686 = vmatprep.subr.bf16.mxu0 0
  %687 = vmatpush1.bf16.msra.mxu0 %v668
  %688 = vmatprep.subr.bf16.mxu0 0
  %689 = vmatpush1.bf16.msra.mxu0 %v669
  %690 = vmatprep.subr.bf16.mxu0 0
  %691 = vmatpush1.bf16.msra.mxu0 %v670
  %692 = vmatprep.subr.bf16.mxu0 0
  %693 = vmatpush1.bf16.msra.mxu0 %v671
  %694 = vmatprep.subr.bf16.mxu0 0
  %695 = vmatpush1.bf16.msra.mxu0 %v672
  %696 = vmatprep.subr.bf16.mxu0 0
  %697 = vmatpush1.bf16.msra.mxu0 %v673
  %698 = vmatprep.subr.bf16.mxu0 0
  %699 = vmatpush1.bf16.msra.mxu0 0
  %700 = vmatprep.subr.bf16.mxu0 0
  %701 = vmatpush1.bf16.msra.mxu0 0
  %702 = vmatprep.subr.bf16.mxu0 0
  %703 = vmatpush1.bf16.msra.mxu0 0
  %704 = vmatprep.subr.bf16.mxu0 0
  %705 = vmatpush1.bf16.msra.mxu0 0
  %706 = vmatprep.subr.bf16.mxu0 0
  %707 = vmatpush1.bf16.msra.mxu0 0
  %708 = vmatprep.subr.bf16.mxu0 0
  %709 = vmatpush1.bf16.msra.mxu0 0
  %710 = vmatprep.subr.bf16.mxu0 0
  %711 = vmatpush1.bf16.msra.mxu0 0
  %712 = vmatprep.subr.bf16.mxu0 0
  %713 = vmatpush1.bf16.msra.mxu0 0
  %714 = vmatprep.mubr.bf16.mxu0 0
  %715 = vmatmul.mubr.bf16.gmra.mrb[0].mxu0 %v610
  %v716 = vpop.f32.mrb[0].mxu0
  %v717 = vadd.f32 %v632, %v716
  %v718 = vpop.f32.mrb[0].mxu0
  %v719 = vpop.f32.mrb[0].mxu0
  %v720 = vpop.f32.mrb[0].mxu0
  %721 = vdwg.mxu0
  %722 = vst [vmem:[%s13] sm:$0xff] %v717
  // Predicated region
  $region54: #{state_decoder_forward.1} parent=0 // pred_check
    _
  $region55: #{state_decoder_forward.1} parent=0 // pred_check_branch
    %724 = sbr.rel (0) target = $region57
  $region56: #{state_decoder_forward.1} parent=0 // pred_region
    _
  $region57: #{state_decoder_forward.1} parent=0 // pred_fallthru
    _
  // Predicated region
  $region58: #{state_decoder_forward.1} parent=0 // pred_check
    _
  $region59: #{state_decoder_forward.1} parent=0 // pred_check_branch
    %726 = sbr.rel (0) target = $region61
  $region60: #{state_decoder_forward.1} parent=0 // pred_region
    _
  $region61: #{state_decoder_forward.1} parent=0 // pred_fallthru
    _

</llo_original>
